<compile_context>
chip_gen: v5e
topology: v5e:2x2
jax: 0.10.0
libtpu: 0.0.40
codegen_flags: <defaults>
</compile_context>

<pallas_src>
import functools

import jax
import jax.numpy as jnp
from jax import lax
from jax.experimental import pallas as pl
from jax.experimental.pallas import tpu as pltpu

# ---------------- configuration (small, consistent with the module) -------------
NUM_CLASS = 9            # len(LABEL_TO_ID)
C1 = NUM_CLASS + 1       # classifier output width (len(LABEL_TO_ID) + 1)
HIDDEN = 32              # stand-in for 768 (encoder hidden size)
D1 = 64                  # stand-in for 512 (first classifier linear)
N_MODEL = 2
ALPHA_T = 0.1            # NLLModel alpha_t (default 0; nonzero to exercise reg path)
VOCAB = 50
CPAD = 128               # class axis padded to one full lane register (MXU/store dense)
TILE_N_MAX = 1024        # row tile; amortizes per-grid-step overhead, tiny VMEM footprint


def _round_up(x, m):
    return (x + m - 1) // m * m


# ---------------------------------- kernel --------------------------------------
def _nll_tile_kernel(h_ref, wc_ref, bc_ref, labels_ref, cw_ref,
                     logits0_ref, part_ref, *, num_class):
    """One row-tile: fused classifier head, weighted-CE and KL-reg partial sums."""
    n_model = h_ref.shape[0]
    tile_n = h_ref.shape[1]
    cpad = logits0_ref.shape[1]
    eps = 1e-5

    labels = labels_ref[...]                                          # (T, 1) int32
    col = lax.broadcasted_iota(jnp.int32, (tile_n, cpad), 1)          # (T, CPAD)
    onehot = (col == labels).astype(jnp.float32)                      # 0 for pad rows (label = -1)
    # rows used by the regularizer: real rows whose label != num_class
    valid = jnp.logical_and(labels >= 0, labels != num_class).astype(jnp.float32)  # (T, 1)
    cw = cw_ref[...]                                                   # (1, CPAD), zeros on pad cols

    wrow = jnp.sum(onehot * cw, axis=-1, keepdims=True)                # (T, 1)
    wden = jnp.sum(wrow)                                               # scalar (same for all models)

    ce_nums = []
    probs = []
    qprod = None                                                       # prod_m (q_m + eps)
    for m in range(n_model):
        h = h_ref[m]                                                   # (T, H) bf16
        # Fused eval-mode classifier: single MXU matmul (padded cols carry bias -1e9).
        logits = jnp.dot(h, wc_ref[m], preferred_element_type=jnp.float32) + bc_ref[m]
        if m == 0:
            logits0_ref[...] = logits.astype(logits0_ref.dtype)        # bf16 store (model_output[1])

        # Shared exp pass: feeds both the CE LSE and the regularizer softmax.
        mx = jnp.max(logits, axis=-1, keepdims=True)
        p_full = jnp.exp(logits - mx)                                  # pad cols -> exp(-1e9) = 0
        sum_full = jnp.sum(p_full, axis=-1, keepdims=True)
        lse = mx + jnp.log(sum_full)                                   # (T, 1)
        tgt = jnp.sum(onehot * logits, axis=-1, keepdims=True)         # target logit
        ce_nums.append(jnp.sum(wrow * (lse - tgt)))                    # sum w[y]*nll

        # Regularizer softmax over the first num_class columns only (zero the extra class).
        e_reg = jnp.where(col == num_class, 0.0, p_full)
        denom = jnp.maximum(jnp.sum(e_reg, axis=-1, keepdims=True), 1e-30)
        q = e_reg * pl.reciprocal(denom, approx=False)                 # exact, (T,1) denom is cheap
        probs.append(q)
        qprod = (q + eps) if qprod is None else qprod * (q + eps)

    inv_m = 1.0 / n_model
    avg = sum(probs) * inv_m                                           # avg_prob
    # sum_m kl_div(avg, q_m) = sum_c avg * (M*log(avg+eps) - log(prod_m(q_m+eps)))
    kl_rows = jnp.sum(avg * (n_model * jnp.log(avg + eps) - jnp.log(qprod)),
                      axis=-1, keepdims=True) * inv_m                  # (T, 1)
    reg_num = jnp.sum(kl_rows * valid)
    reg_den = jnp.sum(valid)

    # Pack per-tile scalars into one lane-dense (1, 1, CPAD) row via mask-sum:
    #   lanes [0..n_model-1] = CE numerators, lane n_model = sum(wrow),
    #   lane n_model+1 = reg numerator, lane n_model+2 = sum(mask)
    lane = lax.broadcasted_iota(jnp.int32, (1, 1, cpad), 2)
    part = jnp.zeros((1, 1, cpad), jnp.float32)
    for idx, val in enumerate(ce_nums + [wden, reg_num, reg_den]):
        part = part + val * (lane == idx).astype(jnp.float32)
    part_ref[...] = part


# ----------------------------- pallas_call wrapper -------------------------------
def nll_head_and_loss(h_all, w1, b1, w2, b2, labels_flat, class_weights,
                      *, alpha_t=ALPHA_T):
    """h_all: (M, N, H); labels_flat: (N,) int32; class_weights: (C1,) f32."""
    m, n, hdim = h_all.shape
    c1 = w2.shape[-1]
    num_class = c1 - 1

    # Fuse Sequential(Linear(H,D1), Dropout(eval=identity), Linear(D1,C1)) per model.
    w1f = w1.astype(jnp.float32)
    w2f = w2.astype(jnp.float32)
    wc = jnp.einsum("mhd,mdc->mhc", w1f, w2f)                          # (M, H, C1)
    bc = jnp.einsum("md,mdc->mc", b1.astype(jnp.float32), w2f) + b2.astype(jnp.float32)

    # Pad the class axis to a full 128-lane register; padded logit columns get bias -1e9
    # so they drop out of max/exp/LSE.  Class weights are 0 on padded columns.
    wc_p = jnp.zeros((m, hdim, CPAD), jnp.bfloat16).at[:, :, :c1].set(wc.astype(jnp.bfloat16))
    bc_p = jnp.full((m, 1, CPAD), -1e9, jnp.float32).at[:, :, :c1].set(bc.reshape(m, 1, c1))
    cw_p = jnp.zeros((1, CPAD), jnp.float32).at[:, :c1].set(
        class_weights.reshape(1, c1).astype(jnp.float32))

    # Row tiling: multiple of 16 (bf16 sublane packing), >= 2 tiles so the parallel
    # grid axis splits across both v7x TensorCores once N is non-trivial.
    tile_n = max(16, min(TILE_N_MAX, _round_up(pl.cdiv(n, 2), 16)))
    n_pad = _round_up(n, tile_n)
    num_tiles = n_pad // tile_n

    if n_pad == n:                                                     # no HBM pad round-trip
        h_p = h_all.astype(jnp.bfloat16)
        labels_p = labels_flat.astype(jnp.int32).reshape(n, 1)
    else:
        h_p = jnp.zeros((m, n_pad, hdim), jnp.bfloat16).at[:, :n, :].set(h_all.astype(jnp.bfloat16))
        labels_p = jnp.full((n_pad, 1), -1, jnp.int32).at[:n, 0].set(labels_flat.astype(jnp.int32))

    # VMEM budget: actual working set (double-buffered streams + resident weights
    # + in-kernel f32 temporaries), with a small floor for compiler scratch.
    vmem_bytes = 2 * (m * tile_n * hdim * 2        # h tile (bf16, double-buffered)
                      + tile_n * CPAD * 2          # logits0 out tile (bf16)
                      + tile_n * 128 * 4           # labels tile (lane-padded)
                      + CPAD * 4                   # partials out tile
                      + m * hdim * CPAD * 2        # fused weights (resident)
                      + m * CPAD * 4               # fused bias
                      + CPAD * 4)                  # class weights
    vmem_bytes += 10 * tile_n * CPAD * 4           # live f32 temporaries (exp/probs/avg/...)
    vmem_limit = max(int(vmem_bytes), 4 << 20)

    const3 = lambda i: (0, 0, 0)   # weights stay resident (no re-DMA across tiles)
    kernel = functools.partial(_nll_tile_kernel, num_class=num_class)

    logits0_p, partials = pl.pallas_call(
        kernel,
        out_shape=(jax.ShapeDtypeStruct((n_pad, CPAD), jnp.bfloat16),
                   jax.ShapeDtypeStruct((num_tiles, 1, CPAD), jnp.float32)),
        grid=(num_tiles,),
        in_specs=[
            pl.BlockSpec((m, tile_n, hdim), lambda i: (0, i, 0)),      # h streamed per tile
            pl.BlockSpec((m, hdim, CPAD), const3),                     # fused W
            pl.BlockSpec((m, 1, CPAD), const3),                        # fused bias
            pl.BlockSpec((tile_n, 1), lambda i: (i, 0)),               # labels per tile
            pl.BlockSpec((1, CPAD), lambda i: (0, 0)),                 # class weights
        ],
        out_specs=(pl.BlockSpec((tile_n, CPAD), lambda i: (i, 0)),
                   pl.BlockSpec((1, 1, CPAD), lambda i: (i, 0, 0))),
        compiler_params=pltpu.CompilerParams(
            dimension_semantics=("parallel",),
            vmem_limit_bytes=vmem_limit),
    )(h_p, wc_p, bc_p, labels_p, cw_p)

    # Global numerator/denominator reduction (tiny scalar math, done by XLA).
    totals = jnp.sum(partials[:, 0, :], axis=0)                        # (CPAD,)
    ce_den = jnp.maximum(totals[m], 1e-12)                             # guard all-padded batch
    ce_mean = jnp.sum(totals[:m]) / ce_den / m                         # mean_m sum(w*nll)/sum(w)
    reg_loss = totals[m + 1] / (totals[m + 2] + 0.001)
    loss = ce_mean + alpha_t * reg_loss
    logits0 = logits0_p[:n, :c1].astype(jnp.float32)                   # small slice, back to f32
    return loss, logits0


# ------------------------------ full forward (glue) ------------------------------
def init_params(key):
    ks = jax.random.split(key, 1 + 4 * N_MODEL)
    emb = (jax.random.normal(ks[0], (N_MODEL, VOCAB, HIDDEN), jnp.float32) * 0.1
           ).astype(jnp.bfloat16)                                      # producer emits h in bf16
    w1 = jnp.stack([jax.random.normal(ks[1 + 4 * i], (HIDDEN, D1), jnp.float32) * 0.05
                    for i in range(N_MODEL)])
    b1 = jnp.stack([jax.random.normal(ks[2 + 4 * i], (D1,), jnp.float32) * 0.01
                    for i in range(N_MODEL)])
    w2 = jnp.stack([jax.random.normal(ks[3 + 4 * i], (D1, C1), jnp.float32) * 0.05
                    for i in range(N_MODEL)])
    b2 = jnp.stack([jax.random.normal(ks[4 + 4 * i], (C1,), jnp.float32) * 0.01
                    for i in range(N_MODEL)])
    # deterministic "crit_weights" (NLLModel weighted=True path)
    class_weights = jnp.linspace(0.5, 1.5, C1, dtype=jnp.float32)
    return dict(emb=emb, w1=w1, b1=b1, w2=w2, b2=b2, class_weights=class_weights)


def nll_model_forward(params, input_ids, attention_mask, labels, epoch=None):
    """input_ids/attention_mask/labels: (n_model, B, S).  Returns (loss, logits_focal_model0)."""
    m, b, s = input_ids.shape
    n = b * s
    # TODO(synk): pretrained transformer + 4-layer BiLSTM encoder replaced by a deterministic
    # per-model bf16 embedding lookup gated by attention_mask (no checkpoint available).
    h = jnp.stack([params["emb"][i][input_ids[i].reshape(n)] for i in range(m)])   # (M, N, H) bf16
    h = h * attention_mask.reshape(m, n, 1).astype(h.dtype)

    # labels coincide across models for the masked_select/stack in NLLModel
    labels_flat = labels[0].reshape(n)

    loss, logits0 = nll_head_and_loss(
        h, params["w1"], params["b1"], params["w2"], params["b2"],
        labels_flat, params["class_weights"], alpha_t=ALPHA_T)
    # TODO(synk): CRF loss term (crf_loss) omitted; per-model loss here is the CE component.
    logits_focal = logits0.reshape(b, s, C1)
    return loss, logits_focal


if __name__ == "__main__":
    B, S = 2, 16
    key = jax.random.PRNGKey(0)
    kp, ki, kl_ = jax.random.split(key, 3)

    params = init_params(kp)
    ids_one = jax.random.randint(ki, (B, S), 0, VOCAB, dtype=jnp.int32)
    input_ids = jnp.stack([ids_one] * N_MODEL)                 # (n_model, B, S)
    attention_mask = jnp.ones((N_MODEL, B, S), jnp.int32)
    labels_one = jax.random.randint(kl_, (B, S), 0, NUM_CLASS + 1, dtype=jnp.int32)
    labels = jnp.stack([labels_one] * N_MODEL)                 # (n_model, B, S)

    loss, logits_focal = nll_model_forward(params, input_ids, attention_mask, labels)
    jax.block_until_ready((loss, logits_focal))
    assert logits_focal.shape == (B, S, C1)
    assert jnp.isfinite(loss)
    print("KERNEL_OK")
</pallas_src>

<mosaic_0001>
module attributes {stable_mosaic.version = 11 : i64} {
  func.func @_nll_tile_kernel(%arg0: i32, %arg1: memref<2x16x32xbf16, #tpu.memory_space<vmem>>, %arg2: memref<2x32x128xbf16, #tpu.memory_space<vmem>>, %arg3: memref<2x1x128xf32, #tpu.memory_space<vmem>>, %arg4: memref<16x1xi32, #tpu.memory_space<vmem>>, %arg5: memref<1x128xf32, #tpu.memory_space<vmem>>, %arg6: memref<16x128xbf16, #tpu.memory_space<vmem>>, %arg7: memref<1x1x128xf32, #tpu.memory_space<vmem>>) attributes {dimension_semantics = [#tpu.dimension_semantics<parallel>], iteration_bounds = array<i64: 2>, scalar_prefetch = 0 : i64, scratch_operands = 0 : i64, tpu.core_type = #tpu.core_type<tc>, window_params = [{transform_indices = @transform_0, window_bounds = array<i64: 2, 16, 32>}, {pipeline_mode = #tpu.pipeline_mode<synchronous>, transform_indices = @transform_1, window_bounds = array<i64: 2, 32, 128>}, {pipeline_mode = #tpu.pipeline_mode<synchronous>, transform_indices = @transform_2, window_bounds = array<i64: 2, 1, 128>}, {transform_indices = @transform_3, window_bounds = array<i64: 16, 1>}, {pipeline_mode = #tpu.pipeline_mode<synchronous>, transform_indices = @transform_4, window_bounds = array<i64: 1, 128>}, {transform_indices = @transform_5, window_bounds = array<i64: 16, 128>}, {transform_indices = @transform_6, window_bounds = array<i64: 1, 1, 128>}]} {
    %c0 = arith.constant 0 : index
    %c0_0 = arith.constant 0 : index
    %0 = vector.load %arg4[%c0, %c0_0] : memref<16x1xi32, #tpu.memory_space<vmem>>, vector<16x1xi32>
    %1 = tpu.iota {dimensions = array<i32: 1>} : vector<16x128xi32>
    %2 = vector.broadcast %0 : vector<16x1xi32> to vector<16x128xi32>
    %3 = arith.cmpi eq, %1, %2 : vector<16x128xi32>
    %4 = arith.extui %3 : vector<16x128xi1> to vector<16x128xi32>
    %5 = arith.sitofp %4 : vector<16x128xi32> to vector<16x128xf32>
    %c0_i32 = arith.constant 0 : i32
    %6 = vector.broadcast %c0_i32 : i32 to vector<16x1xi32>
    %7 = arith.cmpi sge, %0, %6 : vector<16x1xi32>
    %c9_i32 = arith.constant 9 : i32
    %8 = vector.broadcast %c9_i32 : i32 to vector<16x1xi32>
    %9 = arith.cmpi ne, %0, %8 : vector<16x1xi32>
    %10 = arith.andi %7, %9 : vector<16x1xi1>
    %11 = arith.extui %10 : vector<16x1xi1> to vector<16x1xi32>
    %12 = arith.sitofp %11 : vector<16x1xi32> to vector<16x1xf32>
    %c0_1 = arith.constant 0 : index
    %c0_2 = arith.constant 0 : index
    %13 = vector.load %arg5[%c0_1, %c0_2] : memref<1x128xf32, #tpu.memory_space<vmem>>, vector<1x128xf32>
    %14 = vector.broadcast %13 : vector<1x128xf32> to vector<16x128xf32>
    %15 = arith.mulf %5, %14 : vector<16x128xf32>
    %cst = arith.constant dense<0.000000e+00> : vector<16xf32>
    %16 = vector.multi_reduction <add>, %15, %cst [1] : vector<16x128xf32> to vector<16xf32>
    %17 = vector.shape_cast %16 : vector<16xf32> to vector<16x1xf32>
    %18 = vector.shape_cast %17 : vector<16x1xf32> to vector<1x16x1xf32>
    %cst_3 = arith.constant dense<0.000000e+00> : vector<1xf32>
    %19 = vector.multi_reduction <add>, %18, %cst_3 [1, 2] : vector<1x16x1xf32> to vector<1xf32>
    %20 = vector.shape_cast %19 : vector<1xf32> to vector<1x1x1xf32>
    %21 = vector.extract %20[0, 0, 0] : f32 from vector<1x1x1xf32>
    %c0_4 = arith.constant 0 : index
    %c0_5 = arith.constant 0 : index
    %c0_6 = arith.constant 0 : index
    %22 = vector.load %arg1[%c0_4, %c0_5, %c0_6] : memref<2x16x32xbf16, #tpu.memory_space<vmem>>, vector<1x16x32xbf16>
    %23 = vector.shape_cast %22 : vector<1x16x32xbf16> to vector<16x32xbf16>
    %c0_7 = arith.constant 0 : index
    %c0_8 = arith.constant 0 : index
    %c0_9 = arith.constant 0 : index
    %24 = vector.load %arg2[%c0_7, %c0_8, %c0_9] : memref<2x32x128xbf16, #tpu.memory_space<vmem>>, vector<1x32x128xbf16>
    %25 = vector.shape_cast %24 : vector<1x32x128xbf16> to vector<32x128xbf16>
    %cst_10 = arith.constant dense<0.000000e+00> : vector<16x128xf32>
    %26 = tpu.matmul %23, %25, %cst_10 {dimension_numbers = #tpu.dot_dimension_numbers<[1], [0], [0], [1], [0, 0, 1, 1], [], []>} : vector<16x32xbf16>, vector<32x128xbf16>, vector<16x128xf32> -> vector<16x128xf32>
    %c0_11 = arith.constant 0 : index
    %c0_12 = arith.constant 0 : index
    %c0_13 = arith.constant 0 : index
    %27 = vector.load %arg3[%c0_11, %c0_12, %c0_13] : memref<2x1x128xf32, #tpu.memory_space<vmem>>, vector<1x1x128xf32>
    %28 = vector.shape_cast %27 : vector<1x1x128xf32> to vector<1x128xf32>
    %29 = vector.broadcast %28 : vector<1x128xf32> to vector<16x128xf32>
    %30 = arith.addf %26, %29 : vector<16x128xf32>
    %31 = arith.truncf %30 : vector<16x128xf32> to vector<16x128xbf16>
    %c0_14 = arith.constant 0 : index
    %c0_15 = arith.constant 0 : index
    %32 = vector.load %arg6[%c0_14, %c0_15] : memref<16x128xbf16, #tpu.memory_space<vmem>>, vector<16x128xbf16>
    tpu.vector_store %arg6[%c0_14, %c0_15], %31 {strides = array<i32>} : memref<16x128xbf16, #tpu.memory_space<vmem>>, vector<16x128xbf16>,
    %cst_16 = arith.constant dense<0xFF800000> : vector<16xf32>
    %33 = vector.multi_reduction <maximumf>, %30, %cst_16 [1] : vector<16x128xf32> to vector<16xf32>
    %34 = vector.shape_cast %33 : vector<16xf32> to vector<16x1xf32>
    %35 = vector.broadcast %34 : vector<16x1xf32> to vector<16x128xf32>
    %36 = arith.subf %30, %35 : vector<16x128xf32>
    %37 = math.exp %36 : vector<16x128xf32>
    %cst_17 = arith.constant dense<0.000000e+00> : vector<16xf32>
    %38 = vector.multi_reduction <add>, %37, %cst_17 [1] : vector<16x128xf32> to vector<16xf32>
    %39 = vector.shape_cast %38 : vector<16xf32> to vector<16x1xf32>
    %40 = math.log %39 : vector<16x1xf32>
    %41 = arith.addf %34, %40 : vector<16x1xf32>
    %42 = arith.mulf %5, %30 : vector<16x128xf32>
    %cst_18 = arith.constant dense<0.000000e+00> : vector<16xf32>
    %43 = vector.multi_reduction <add>, %42, %cst_18 [1] : vector<16x128xf32> to vector<16xf32>
    %44 = vector.shape_cast %43 : vector<16xf32> to vector<16x1xf32>
    %45 = arith.subf %41, %44 : vector<16x1xf32>
    %46 = arith.mulf %17, %45 : vector<16x1xf32>
    %47 = vector.shape_cast %46 : vector<16x1xf32> to vector<1x16x1xf32>
    %cst_19 = arith.constant dense<0.000000e+00> : vector<1xf32>
    %48 = vector.multi_reduction <add>, %47, %cst_19 [1, 2] : vector<1x16x1xf32> to vector<1xf32>
    %49 = vector.shape_cast %48 : vector<1xf32> to vector<1x1x1xf32>
    %50 = vector.extract %49[0, 0, 0] : f32 from vector<1x1x1xf32>
    %c9_i32_20 = arith.constant 9 : i32
    %51 = vector.broadcast %c9_i32_20 : i32 to vector<16x128xi32>
    %52 = arith.cmpi eq, %1, %51 : vector<16x128xi32>
    %cst_21 = arith.constant 0.000000e+00 : f32
    %53 = vector.broadcast %cst_21 : f32 to vector<16x128xf32>
    %54 = arith.select %52, %53, %37 : vector<16x128xi1>, vector<16x128xf32>
    %cst_22 = arith.constant dense<0.000000e+00> : vector<16xf32>
    %55 = vector.multi_reduction <add>, %54, %cst_22 [1] : vector<16x128xf32> to vector<16xf32>
    %56 = vector.shape_cast %55 : vector<16xf32> to vector<16x1xf32>
    %cst_23 = arith.constant 1.000000e-30 : f32
    %57 = vector.broadcast %cst_23 : f32 to vector<16x1xf32>
    %58 = arith.maximumf %56, %57 : vector<16x1xf32>
    %59 = tpu.reciprocal %58 : vector<16x1xf32> -> vector<16x1xf32>
    %60 = vector.broadcast %59 : vector<16x1xf32> to vector<16x128xf32>
    %61 = arith.mulf %54, %60 : vector<16x128xf32>
    %cst_24 = arith.constant 9.99999974E-6 : f32
    %62 = vector.broadcast %cst_24 : f32 to vector<16x128xf32>
    %63 = arith.addf %61, %62 : vector<16x128xf32>
    %c1 = arith.constant 1 : index
    %c0_25 = arith.constant 0 : index
    %c0_26 = arith.constant 0 : index
    %64 = vector.load %arg1[%c1, %c0_25, %c0_26] : memref<2x16x32xbf16, #tpu.memory_space<vmem>>, vector<1x16x32xbf16>
    %65 = vector.shape_cast %64 : vector<1x16x32xbf16> to vector<16x32xbf16>
    %c1_27 = arith.constant 1 : index
    %c0_28 = arith.constant 0 : index
    %c0_29 = arith.constant 0 : index
    %66 = vector.load %arg2[%c1_27, %c0_28, %c0_29] : memref<2x32x128xbf16, #tpu.memory_space<vmem>>, vector<1x32x128xbf16>
    %67 = vector.shape_cast %66 : vector<1x32x128xbf16> to vector<32x128xbf16>
    %cst_30 = arith.constant dense<0.000000e+00> : vector<16x128xf32>
    %68 = tpu.matmul %65, %67, %cst_30 {dimension_numbers = #tpu.dot_dimension_numbers<[1], [0], [0], [1], [0, 0, 1, 1], [], []>} : vector<16x32xbf16>, vector<32x128xbf16>, vector<16x128xf32> -> vector<16x128xf32>
    %c1_31 = arith.constant 1 : index
    %c0_32 = arith.constant 0 : index
    %c0_33 = arith.constant 0 : index
    %69 = vector.load %arg3[%c1_31, %c0_32, %c0_33] : memref<2x1x128xf32, #tpu.memory_space<vmem>>, vector<1x1x128xf32>
    %70 = vector.shape_cast %69 : vector<1x1x128xf32> to vector<1x128xf32>
    %71 = vector.broadcast %70 : vector<1x128xf32> to vector<16x128xf32>
    %72 = arith.addf %68, %71 : vector<16x128xf32>
    %cst_34 = arith.constant dense<0xFF800000> : vector<16xf32>
    %73 = vector.multi_reduction <maximumf>, %72, %cst_34 [1] : vector<16x128xf32> to vector<16xf32>
    %74 = vector.shape_cast %73 : vector<16xf32> to vector<16x1xf32>
    %75 = vector.broadcast %74 : vector<16x1xf32> to vector<16x128xf32>
    %76 = arith.subf %72, %75 : vector<16x128xf32>
    %77 = math.exp %76 : vector<16x128xf32>
    %cst_35 = arith.constant dense<0.000000e+00> : vector<16xf32>
    %78 = vector.multi_reduction <add>, %77, %cst_35 [1] : vector<16x128xf32> to vector<16xf32>
    %79 = vector.shape_cast %78 : vector<16xf32> to vector<16x1xf32>
    %80 = math.log %79 : vector<16x1xf32>
    %81 = arith.addf %74, %80 : vector<16x1xf32>
    %82 = arith.mulf %5, %72 : vector<16x128xf32>
    %cst_36 = arith.constant dense<0.000000e+00> : vector<16xf32>
    %83 = vector.multi_reduction <add>, %82, %cst_36 [1] : vector<16x128xf32> to vector<16xf32>
    %84 = vector.shape_cast %83 : vector<16xf32> to vector<16x1xf32>
    %85 = arith.subf %81, %84 : vector<16x1xf32>
    %86 = arith.mulf %17, %85 : vector<16x1xf32>
    %87 = vector.shape_cast %86 : vector<16x1xf32> to vector<1x16x1xf32>
    %cst_37 = arith.constant dense<0.000000e+00> : vector<1xf32>
    %88 = vector.multi_reduction <add>, %87, %cst_37 [1, 2] : vector<1x16x1xf32> to vector<1xf32>
    %89 = vector.shape_cast %88 : vector<1xf32> to vector<1x1x1xf32>
    %90 = vector.extract %89[0, 0, 0] : f32 from vector<1x1x1xf32>
    %c9_i32_38 = arith.constant 9 : i32
    %91 = vector.broadcast %c9_i32_38 : i32 to vector<16x128xi32>
    %92 = arith.cmpi eq, %1, %91 : vector<16x128xi32>
    %cst_39 = arith.constant 0.000000e+00 : f32
    %93 = vector.broadcast %cst_39 : f32 to vector<16x128xf32>
    %94 = arith.select %92, %93, %77 : vector<16x128xi1>, vector<16x128xf32>
    %cst_40 = arith.constant dense<0.000000e+00> : vector<16xf32>
    %95 = vector.multi_reduction <add>, %94, %cst_40 [1] : vector<16x128xf32> to vector<16xf32>
    %96 = vector.shape_cast %95 : vector<16xf32> to vector<16x1xf32>
    %cst_41 = arith.constant 1.000000e-30 : f32
    %97 = vector.broadcast %cst_41 : f32 to vector<16x1xf32>
    %98 = arith.maximumf %96, %97 : vector<16x1xf32>
    %99 = tpu.reciprocal %98 : vector<16x1xf32> -> vector<16x1xf32>
    %100 = vector.broadcast %99 : vector<16x1xf32> to vector<16x128xf32>
    %101 = arith.mulf %94, %100 : vector<16x128xf32>
    %cst_42 = arith.constant 9.99999974E-6 : f32
    %102 = vector.broadcast %cst_42 : f32 to vector<16x128xf32>
    %103 = arith.addf %101, %102 : vector<16x128xf32>
    %104 = arith.mulf %63, %103 : vector<16x128xf32>
    %cst_43 = arith.constant 0.000000e+00 : f32
    %105 = vector.broadcast %cst_43 : f32 to vector<16x128xf32>
    %106 = arith.addf %105, %61 : vector<16x128xf32>
    %107 = arith.addf %106, %101 : vector<16x128xf32>
    %cst_44 = arith.constant 5.000000e-01 : f32
    %108 = vector.broadcast %cst_44 : f32 to vector<16x128xf32>
    %109 = arith.mulf %107, %108 : vector<16x128xf32>
    %cst_45 = arith.constant 9.99999974E-6 : f32
    %110 = vector.broadcast %cst_45 : f32 to vector<16x128xf32>
    %111 = arith.addf %109, %110 : vector<16x128xf32>
    %112 = math.log %111 : vector<16x128xf32>
    %cst_46 = arith.constant 2.000000e+00 : f32
    %113 = vector.broadcast %cst_46 : f32 to vector<16x128xf32>
    %114 = arith.mulf %113, %112 : vector<16x128xf32>
    %115 = math.log %104 : vector<16x128xf32>
    %116 = arith.subf %114, %115 : vector<16x128xf32>
    %117 = arith.mulf %109, %116 : vector<16x128xf32>
    %cst_47 = arith.constant dense<0.000000e+00> : vector<16xf32>
    %118 = vector.multi_reduction <add>, %117, %cst_47 [1] : vector<16x128xf32> to vector<16xf32>
    %119 = vector.shape_cast %118 : vector<16xf32> to vector<16x1xf32>
    %cst_48 = arith.constant 5.000000e-01 : f32
    %120 = vector.broadcast %cst_48 : f32 to vector<16x1xf32>
    %121 = arith.mulf %119, %120 : vector<16x1xf32>
    %122 = arith.mulf %121, %12 : vector<16x1xf32>
    %123 = vector.shape_cast %122 : vector<16x1xf32> to vector<1x16x1xf32>
    %cst_49 = arith.constant dense<0.000000e+00> : vector<1xf32>
    %124 = vector.multi_reduction <add>, %123, %cst_49 [1, 2] : vector<1x16x1xf32> to vector<1xf32>
    %125 = vector.shape_cast %124 : vector<1xf32> to vector<1x1x1xf32>
    %126 = vector.extract %125[0, 0, 0] : f32 from vector<1x1x1xf32>
    %127 = vector.shape_cast %12 : vector<16x1xf32> to vector<1x16x1xf32>
    %cst_50 = arith.constant dense<0.000000e+00> : vector<1xf32>
    %128 = vector.multi_reduction <add>, %127, %cst_50 [1, 2] : vector<1x16x1xf32> to vector<1xf32>
    %129 = vector.shape_cast %128 : vector<1xf32> to vector<1x1x1xf32>
    %130 = vector.extract %129[0, 0, 0] : f32 from vector<1x1x1xf32>
    %131 = tpu.iota {dimensions = array<i32: 2>} : vector<1x1x128xi32>
    %cst_51 = arith.constant 0.000000e+00 : f32
    %132 = vector.broadcast %cst_51 : f32 to vector<1x1x128xf32>
    %c0_i32_52 = arith.constant 0 : i32
    %133 = vector.broadcast %c0_i32_52 : i32 to vector<1x1x128xi32>
    %134 = arith.cmpi eq, %131, %133 : vector<1x1x128xi32>
    %135 = arith.extui %134 : vector<1x1x128xi1> to vector<1x1x128xi32>
    %136 = arith.sitofp %135 : vector<1x1x128xi32> to vector<1x1x128xf32>
    %137 = vector.broadcast %50 : f32 to vector<1x1x128xf32>
    %138 = arith.mulf %137, %136 : vector<1x1x128xf32>
    %139 = arith.addf %132, %138 : vector<1x1x128xf32>
    %c1_i32 = arith.constant 1 : i32
    %140 = vector.broadcast %c1_i32 : i32 to vector<1x1x128xi32>
    %141 = arith.cmpi eq, %131, %140 : vector<1x1x128xi32>
    %142 = arith.extui %141 : vector<1x1x128xi1> to vector<1x1x128xi32>
    %143 = arith.sitofp %142 : vector<1x1x128xi32> to vector<1x1x128xf32>
    %144 = vector.broadcast %90 : f32 to vector<1x1x128xf32>
    %145 = arith.mulf %144, %143 : vector<1x1x128xf32>
    %146 = arith.addf %139, %145 : vector<1x1x128xf32>
    %c2_i32 = arith.constant 2 : i32
    %147 = vector.broadcast %c2_i32 : i32 to vector<1x1x128xi32>
    %148 = arith.cmpi eq, %131, %147 : vector<1x1x128xi32>
    %149 = arith.extui %148 : vector<1x1x128xi1> to vector<1x1x128xi32>
    %150 = arith.sitofp %149 : vector<1x1x128xi32> to vector<1x1x128xf32>
    %151 = vector.broadcast %21 : f32 to vector<1x1x128xf32>
    %152 = arith.mulf %151, %150 : vector<1x1x128xf32>
    %153 = arith.addf %146, %152 : vector<1x1x128xf32>
    %c3_i32 = arith.constant 3 : i32
    %154 = vector.broadcast %c3_i32 : i32 to vector<1x1x128xi32>
    %155 = arith.cmpi eq, %131, %154 : vector<1x1x128xi32>
    %156 = arith.extui %155 : vector<1x1x128xi1> to vector<1x1x128xi32>
    %157 = arith.sitofp %156 : vector<1x1x128xi32> to vector<1x1x128xf32>
    %158 = vector.broadcast %126 : f32 to vector<1x1x128xf32>
    %159 = arith.mulf %158, %157 : vector<1x1x128xf32>
    %160 = arith.addf %153, %159 : vector<1x1x128xf32>
    %c4_i32 = arith.constant 4 : i32
    %161 = vector.broadcast %c4_i32 : i32 to vector<1x1x128xi32>
    %162 = arith.cmpi eq, %131, %161 : vector<1x1x128xi32>
    %163 = arith.extui %162 : vector<1x1x128xi1> to vector<1x1x128xi32>
    %164 = arith.sitofp %163 : vector<1x1x128xi32> to vector<1x1x128xf32>
    %165 = vector.broadcast %130 : f32 to vector<1x1x128xf32>
    %166 = arith.mulf %165, %164 : vector<1x1x128xf32>
    %167 = arith.addf %160, %166 : vector<1x1x128xf32>
    %c0_53 = arith.constant 0 : index
    %c0_54 = arith.constant 0 : index
    %c0_55 = arith.constant 0 : index
    %168 = vector.load %arg7[%c0_53, %c0_54, %c0_55] : memref<1x1x128xf32, #tpu.memory_space<vmem>>, vector<1x1x128xf32>
    tpu.vector_store %arg7[%c0_53, %c0_54, %c0_55], %167 {strides = array<i32>} : memref<1x1x128xf32, #tpu.memory_space<vmem>>, vector<1x1x128xf32>,
    return
  }
  func.func @transform_0(%arg0: i32) -> (i32, i32, i32) {
    %c0_i32 = arith.constant 0 : i32
    %c0_i32_0 = arith.constant 0 : i32
    %c0_i32_1 = arith.constant 0 : i32
    return %c0_i32, %arg0, %c0_i32_0 : i32, i32, i32
  }
  func.func @transform_1(%arg0: i32) -> (i32, i32, i32) {
    %c0_i32 = arith.constant 0 : i32
    %c0_i32_0 = arith.constant 0 : i32
    %c0_i32_1 = arith.constant 0 : i32
    %c0_i32_2 = arith.constant 0 : i32
    return %c0_i32, %c0_i32_0, %c0_i32_1 : i32, i32, i32
  }
  func.func @transform_2(%arg0: i32) -> (i32, i32, i32) {
    %c0_i32 = arith.constant 0 : i32
    %c0_i32_0 = arith.constant 0 : i32
    %c0_i32_1 = arith.constant 0 : i32
    %c0_i32_2 = arith.constant 0 : i32
    return %c0_i32, %c0_i32_0, %c0_i32_1 : i32, i32, i32
  }
  func.func @transform_3(%arg0: i32) -> (i32, i32) {
    %c0_i32 = arith.constant 0 : i32
    %c0_i32_0 = arith.constant 0 : i32
    return %arg0, %c0_i32 : i32, i32
  }
  func.func @transform_4(%arg0: i32) -> (i32, i32) {
    %c0_i32 = arith.constant 0 : i32
    %c0_i32_0 = arith.constant 0 : i32
    %c0_i32_1 = arith.constant 0 : i32
    return %c0_i32, %c0_i32_0 : i32, i32
  }
  func.func @transform_5(%arg0: i32) -> (i32, i32) {
    %c0_i32 = arith.constant 0 : i32
    %c0_i32_0 = arith.constant 0 : i32
    return %arg0, %c0_i32 : i32, i32
  }
  func.func @transform_6(%arg0: i32) -> (i32, i32, i32) {
    %c0_i32 = arith.constant 0 : i32
    %c0_i32_0 = arith.constant 0 : i32
    %c0_i32_1 = arith.constant 0 : i32
    return %arg0, %c0_i32, %c0_i32_0 : i32, i32, i32
  }
}

</mosaic_0001>

<llo_original>
// kernel: tpu_custom_call.1
$region0: #{tpu_custom_call.1}
  #allocation0 [shape = 'u32[]', space=smem, size = 0x4, offset = 0x4, fixed_abs, tag = 'smem constant byte address 0x4 - core index']
  #allocation1 [shape = 'u32[72,128]{1,0:T(1,128)}', space=vmem, size = 0x9000, scoped, tag = 'internal scratch']
  %s0 = inlined_call_operand.vmem [shape: bf16[2,32,32], index: 0, kind: input, shape index: {}]
  %s1 = inlined_call_operand.hbm [shape: bf16[2,32,128], index: 1, kind: input, shape index: {}]
  %s2 = inlined_call_operand.hbm [shape: f32[2,1,128], index: 2, kind: input, shape index: {}]
  %s3 = inlined_call_operand.vmem [shape: s32[32,1], index: 3, kind: input, shape index: {}]
  %s4 = inlined_call_operand.vmem [shape: f32[1,128], index: 4, kind: input, shape index: {}]
  %s5 = inlined_call_operand.hbm [shape: bf16[32,128], index: 5, kind: output, shape index: {0}]
  %s6 = inlined_call_operand.hbm [shape: f32[2,1,128], index: 6, kind: output, shape index: {1}]
  %7 = xla_tuple %s5, %s6
  %s8 = sld [smem:[#allocation0]]
  $region110: #{tpu_custom_call.1} parent=0
    _
  %s10 = ssub.s32 1, %s8
  %s11 = scalar_select 0, %s10, %s8
  $region1: #{tpu_custom_call.1} parent=0
    #allocation2 [shape = 'u8[16384]{0}', space=vmem, size = 0x4000, scoped, tag = 'input window, operand 0']
    #allocation3 [shape = 'u8[16384]{0}', space=vmem, size = 0x4000, scoped, tag = 'input window, operand 1, single buffered']
    #allocation4 [shape = 's32[2]{0}', space=sflag, size = 0x8, scoped, tag = 'scoped memory for tpu_custom_call.1']
    #allocation5 [shape = 's32[2]{0}', space=sflag, size = 0x8, scoped, tag = 'scoped memory for tpu_custom_call.1']
    #allocation6 [shape = 'u8[1024]{0}', space=vmem, size = 0x400, scoped, tag = 'input window, operand 2, single buffered']
    #allocation7 [shape = 's32[1]{0}', space=sflag, size = 0x4, scoped, tag = 'scoped memory for tpu_custom_call.1']
    #allocation8 [shape = 'u8[8192]{0}', space=vmem, size = 0x2000, scoped, tag = 'output window, operand 0']
    #allocation9 [shape = 'u8[1024]{0}', space=vmem, size = 0x400, scoped, tag = 'output window, operand 1']
    #allocation10 [shape = 's32[2]{0}', space=sflag, size = 0x8, scoped, tag = 'scoped memory for tpu_custom_call.1']
    %12 = vsyncpa [#allocation4], 0
    %13 = vsyncpa [#allocation7], 0
    %14 = vsyncpa [#allocation5], 0
    %s15 = scalar_lea.sflag [#allocation5], 1
    %16 = vsyncpa %s15, 0
    %17 = vsyncpa [#allocation10], 0
    %s18 = scalar_lea.sflag [#allocation10], 1
    %19 = vsyncpa %s18, 0
    loop: start=0, step=1, limit=4
    $region2: #{tpu_custom_call.1} parent=1 // loop_pre_header
      _
    $region3: #{tpu_custom_call.1} parent=1 // loop_header
      %s21 = sphi 0, %s25
      %p22 = scmp.ge.s32.totalorder %s21, 4
      %s31 = sphi 0, %s33
      %s34 = sphi 0, %s31
      %s35 = sphi 0, %s34
      %s51 = sphi 0, %s35
      %s55 = sphi 0, %s55
      %s57 = sphi 0, %s55
      %s58 = sphi 0, %s57
      %s72 = sphi 0, %s58
      %s76 = sphi 0, %s76
      %s78 = sphi 0, %s76
      %s79 = sphi 0, %s78
      %s93 = sphi 0, %s79
      %s99 = sphi 0, %s101
      %s102 = sphi 0, %s99
      %s103 = sphi 0, %s102
      %s119 = sphi 0, %s103
      %s123 = sphi 0, %s123
      %s125 = sphi 0, %s123
      %s126 = sphi 0, %s125
      %s140 = sphi 0, %s126
      %s146 = sphi 0, %s148
      %s149 = sphi 0, %s146
      %s150 = sphi 0, %s149
      %s166 = sphi 0, %s150
      %s172 = sphi 0, %s174
      %s175 = sphi 0, %s172
      %s176 = sphi 0, %s175
      %s192 = sphi 0, %s176
    $region4: #{tpu_custom_call.1} parent=1 // loop_header_branch
      %24 = sbr.rel (%p22) target = $region8
    $region5: #{tpu_custom_call.1} parent=1 // loop_body
      %s26 = ssub.s32 %s21, 1
      %s27 = ssub.s32 %s21, 2
      %s28 = sadd.s32 %s21, 1
      %s29 = ssub.s32 %s21, %s28
      %p30 = scmp.eq.s32.totalorder %s29, 0
      %s32 = sadd.s32 %s31, 1
      %s33 = scalar_select %p30, %s31, %s32
      %p36 = pneg %p30
      %p37 = scmp.eq.s32.totalorder %s21, 1
      %p38 = por %p36, %p37
      %p39 = scmp.ne.s32.totalorder %s31, %s34
      %p40 = scmp.eq.s32.totalorder %s21, 0
      %p41 = por %p39, %p40
      %p42 = scmp.ne.s32.totalorder %s31, %s34
      %p43 = scmp.eq.s32.totalorder %s26, 1
      %p44 = por %p42, %p43
      %p45 = scmp.ne.s32.totalorder %s34, %s35
      %p46 = scmp.eq.s32.totalorder %s26, 0
      %p47 = por %p45, %p46
      %p48 = scmp.ne.s32.totalorder %s34, %s35
      %p49 = scmp.eq.s32.totalorder %s27, 1
      %p50 = por %p48, %p49
      %p52 = scmp.ne.s32.totalorder %s35, %s51
      %p53 = scmp.eq.s32.totalorder %s27, 0
      %p54 = por %p52, %p53
      %s56 = sadd.s32 %s55, 1
      %p59 = scmp.eq.s32.totalorder %s21, 1
      %p60 = scmp.ne.s32.totalorder %s55, %s57
      %p61 = scmp.eq.s32.totalorder %s21, 0
      %p62 = por %p60, %p61
      %p63 = scmp.ne.s32.totalorder %s55, %s57
      %p64 = scmp.eq.s32.totalorder %s26, 1
      %p65 = por %p63, %p64
      %p66 = scmp.ne.s32.totalorder %s57, %s58
      %p67 = scmp.eq.s32.totalorder %s26, 0
      %p68 = por %p66, %p67
      %p69 = scmp.ne.s32.totalorder %s57, %s58
      %p70 = scmp.eq.s32.totalorder %s27, 1
      %p71 = por %p69, %p70
      %p73 = scmp.ne.s32.totalorder %s58, %s72
      %p74 = scmp.eq.s32.totalorder %s27, 0
      %p75 = por %p73, %p74
      %s77 = sadd.s32 %s76, 1
      %p80 = scmp.eq.s32.totalorder %s21, 1
      %p81 = scmp.ne.s32.totalorder %s76, %s78
      %p82 = scmp.eq.s32.totalorder %s21, 0
      %p83 = por %p81, %p82
      %p84 = scmp.ne.s32.totalorder %s76, %s78
      %p85 = scmp.eq.s32.totalorder %s26, 1
      %p86 = por %p84, %p85
      %p87 = scmp.ne.s32.totalorder %s78, %s79
      %p88 = scmp.eq.s32.totalorder %s26, 0
      %p89 = por %p87, %p88
      %p90 = scmp.ne.s32.totalorder %s78, %s79
      %p91 = scmp.eq.s32.totalorder %s27, 1
      %p92 = por %p90, %p91
      %p94 = scmp.ne.s32.totalorder %s79, %s93
      %p95 = scmp.eq.s32.totalorder %s27, 0
      %p96 = por %p94, %p95
      %s97 = ssub.s32 %s21, %s28
      %p98 = scmp.eq.s32.totalorder %s97, 0
      %s100 = sadd.s32 %s99, 1
      %s101 = scalar_select %p98, %s99, %s100
      %p104 = pneg %p98
      %p105 = scmp.eq.s32.totalorder %s21, 1
      %p106 = por %p104, %p105
      %p107 = scmp.ne.s32.totalorder %s99, %s102
      %p108 = scmp.eq.s32.totalorder %s21, 0
      %p109 = por %p107, %p108
      %p110 = scmp.ne.s32.totalorder %s99, %s102
      %p111 = scmp.eq.s32.totalorder %s26, 1
      %p112 = por %p110, %p111
      %p113 = scmp.ne.s32.totalorder %s102, %s103
      %p114 = scmp.eq.s32.totalorder %s26, 0
      %p115 = por %p113, %p114
      %p116 = scmp.ne.s32.totalorder %s102, %s103
      %p117 = scmp.eq.s32.totalorder %s27, 1
      %p118 = por %p116, %p117
      %p120 = scmp.ne.s32.totalorder %s103, %s119
      %p121 = scmp.eq.s32.totalorder %s27, 0
      %p122 = por %p120, %p121
      %s124 = sadd.s32 %s123, 1
      %p127 = scmp.eq.s32.totalorder %s21, 1
      %p128 = scmp.ne.s32.totalorder %s123, %s125
      %p129 = scmp.eq.s32.totalorder %s21, 0
      %p130 = por %p128, %p129
      %p131 = scmp.ne.s32.totalorder %s123, %s125
      %p132 = scmp.eq.s32.totalorder %s26, 1
      %p133 = por %p131, %p132
      %p134 = scmp.ne.s32.totalorder %s125, %s126
      %p135 = scmp.eq.s32.totalorder %s26, 0
      %p136 = por %p134, %p135
      %p137 = scmp.ne.s32.totalorder %s125, %s126
      %p138 = scmp.eq.s32.totalorder %s27, 1
      %p139 = por %p137, %p138
      %p141 = scmp.ne.s32.totalorder %s126, %s140
      %p142 = scmp.eq.s32.totalorder %s27, 0
      %p143 = por %p141, %p142
      %s144 = ssub.s32 %s21, %s28
      %p145 = scmp.eq.s32.totalorder %s144, 0
      %s147 = sadd.s32 %s146, 1
      %s148 = scalar_select %p145, %s146, %s147
      %p151 = pneg %p145
      %p152 = scmp.eq.s32.totalorder %s21, 1
      %p153 = por %p151, %p152
      %p154 = scmp.ne.s32.totalorder %s146, %s149
      %p155 = scmp.eq.s32.totalorder %s21, 0
      %p156 = por %p154, %p155
      %p157 = scmp.ne.s32.totalorder %s146, %s149
      %p158 = scmp.eq.s32.totalorder %s26, 1
      %p159 = por %p157, %p158
      %p160 = scmp.ne.s32.totalorder %s149, %s150
      %p161 = scmp.eq.s32.totalorder %s26, 0
      %p162 = por %p160, %p161
      %p163 = scmp.ne.s32.totalorder %s149, %s150
      %p164 = scmp.eq.s32.totalorder %s27, 1
      %p165 = por %p163, %p164
      %p167 = scmp.ne.s32.totalorder %s150, %s166
      %p168 = scmp.eq.s32.totalorder %s27, 0
      %p169 = por %p167, %p168
      %s170 = ssub.s32 %s21, %s28
      %p171 = scmp.eq.s32.totalorder %s170, 0
      %s173 = sadd.s32 %s172, 1
      %s174 = scalar_select %p171, %s172, %s173
      %p177 = pneg %p171
      %p178 = scmp.eq.s32.totalorder %s21, 1
      %p179 = por %p177, %p178
      %p180 = scmp.ne.s32.totalorder %s172, %s175
      %p181 = scmp.eq.s32.totalorder %s21, 0
      %p182 = por %p180, %p181
      %p183 = scmp.ne.s32.totalorder %s172, %s175
      %p184 = scmp.eq.s32.totalorder %s26, 1
      %p185 = por %p183, %p184
      %p186 = scmp.ne.s32.totalorder %s175, %s176
      %p187 = scmp.eq.s32.totalorder %s26, 0
      %p188 = por %p186, %p187
      %p189 = scmp.ne.s32.totalorder %s175, %s176
      %p190 = scmp.eq.s32.totalorder %s27, 1
      %p191 = por %p189, %p190
      %p193 = scmp.ne.s32.totalorder %s176, %s192
      %p194 = scmp.eq.s32.totalorder %s27, 0
      %p195 = por %p193, %p194
      %p196 = scmp.le.s32.totalorder 1, %s21
      %p197 = scmp.lt.s32.totalorder %s21, 3
      %p198 = pnand %p196, %p197
      %p199 = pneg %p198
      // Predicated region
      $region9: #{tpu_custom_call.1} parent=5 // pred_check
        _
      $region10: #{tpu_custom_call.1} parent=5 // pred_check_branch
        %201 = sbr.rel (%p198) target = $region12
      $region11: #{tpu_custom_call.1} parent=5 // pred_region
        %s202 = ssub.s32 %s21, 1
        // Predicated region
        $region13: #{tpu_custom_call.1} parent=11 // pred_check
          %p203 = pneg %p68
        $region14: #{tpu_custom_call.1} parent=11 // pred_check_branch
          %205 = sbr.rel (%p203) target = $region16
        $region15: #{tpu_custom_call.1} parent=11 // pred_region
          %207 = vsyncadd [#allocation4], 0
          %s208 = sshll.u32 %s1, 4
          %s209 = int_to_ptr.hbm [resolvable:$true] %s208
          %s210 = sshll.u32 [#allocation3], 4
          %s211 = int_to_ptr.vmem [resolvable:$true] %s210
          %216 = dma.hbm_to_vmem [thread:$0]  %s209, 512, %s211, [#allocation4], 64, 64, 4
        $region16: #{tpu_custom_call.1} parent=11 // pred_fallthru
          _
        // Predicated region
        $region17: #{tpu_custom_call.1} parent=11 // pred_check
          %p217 = pneg %p89
        $region18: #{tpu_custom_call.1} parent=11 // pred_check_branch
          %219 = sbr.rel (%p217) target = $region20
        $region19: #{tpu_custom_call.1} parent=11 // pred_region
          %221 = vsyncadd [#allocation7], 0
          %s222 = sshll.u32 %s2, 4
          %s223 = int_to_ptr.hbm [resolvable:$true] %s222
          %s224 = sshll.u32 [#allocation6], 4
          %s225 = int_to_ptr.vmem [resolvable:$true] %s224
          %230 = dma.hbm_to_vmem [thread:$0]  %s223, 32, %s225, [#allocation7], 16, 16, 1
        $region20: #{tpu_custom_call.1} parent=11 // pred_fallthru
          _
        // Predicated region
        $region21: #{tpu_custom_call.1} parent=11 // pred_check
          %p231 = pneg %p136
        $region22: #{tpu_custom_call.1} parent=11 // pred_check_branch
          %233 = sbr.rel (%p231) target = $region24
        $region23: #{tpu_custom_call.1} parent=11 // pred_region
          _
        $region24: #{tpu_custom_call.1} parent=11 // pred_fallthru
          _
      $region12: #{tpu_custom_call.1} parent=5 // pred_fallthru
        _
      %p234 = scmp.lt.s32.totalorder %s21, 2
      // Predicated region
      $region25: #{tpu_custom_call.1} parent=5 // pred_check
        %p235 = pneg %p234
      $region26: #{tpu_custom_call.1} parent=5 // pred_check_branch
        %237 = sbr.rel (%p235) target = $region28
      $region27: #{tpu_custom_call.1} parent=5 // pred_region
        // Predicated region
        $region29: #{tpu_custom_call.1} parent=27 // pred_check
          %p238 = pneg %p41
        $region30: #{tpu_custom_call.1} parent=27 // pred_check_branch
          %240 = sbr.rel (%p238) target = $region32
        $region31: #{tpu_custom_call.1} parent=27 // pred_region
          %s241 = sand.u32 %s31, 1
          %s242 = sand.u32 %s31, 1
          %s243 = smul.addr %s242, 16
          %s244 = scalar_lea.vmem [#allocation2], %s243
          %s245 = smul.u32 2, %s21
          %s246 = smul.addr %s245, 4
          %s247 = scalar_lea.vmem %s0, %s246
          // Predicated region
          $region33: #{tpu_custom_call.1} parent=31 // pred_check
            _
          $region34: #{tpu_custom_call.1} parent=31 // pred_check_branch
            %249 = sbr.rel (0) target = $region36
          $region35: #{tpu_custom_call.1} parent=31 // pred_region
            // Predicated region
            $region37: #{tpu_custom_call.1} parent=35 // pred_check
              _
            $region38: #{tpu_custom_call.1} parent=35 // pred_check_branch
              %251 = sbr.rel target = $region40
            $region39: #{tpu_custom_call.1} parent=35 // pred_region
              // Predicated region
              $region52: #{tpu_custom_call.1} parent=39 // pred_check
                _
              $region53: #{tpu_custom_call.1} parent=39 // pred_check_branch
                %273 = sbr.rel (0) target = $region55
              $region54: #{tpu_custom_call.1} parent=39 // pred_region
                loop: start=0, step=1, limit=1
                $region56: #{tpu_custom_call.1} parent=54 // loop_pre_header
                  _
                $region57: #{tpu_custom_call.1} parent=54 // loop_header
                  %s275 = sphi 0, %s279
                  %p276 = scmp.ge.s32.totalorder %s275, 1
                  %s280 = sphi %s247, %s247
                  %s281 = sphi %s244, %s244
                $region58: #{tpu_custom_call.1} parent=54 // loop_header_branch
                  %278 = sbr.rel (%p276) target = $region62
                $region59: #{tpu_custom_call.1} parent=54 // loop_body
                  _
                $region60: #{tpu_custom_call.1} parent=54 // loop_footer
                  %s279 = sadd.s32 1, %s275
                $region61: #{tpu_custom_call.1} parent=54 // loop_footer_branch
                  %274 = sbr.rel target = $region57
                $region62: #{tpu_custom_call.1} parent=54 // loop_exit
                  _
                %s283 = ssub.s32 16, 1
                loop: start=0, step=1, limit=1
                $region63: #{tpu_custom_call.1} parent=54 // loop_pre_header
                  _
                $region64: #{tpu_custom_call.1} parent=54 // loop_header
                  %s285 = sphi 0, %s289
                  %p286 = scmp.ge.s32.totalorder %s285, 1
                  %s290 = sphi %s247, %s247
                  %s291 = sphi %s244, %s244
                $region65: #{tpu_custom_call.1} parent=54 // loop_header_branch
                  %288 = sbr.rel (%p286) target = $region69
                $region66: #{tpu_custom_call.1} parent=54 // loop_body
                  %v292 = vld [vmem:[%s290] sm:%s283]
                  %293 = vst [vmem:[%s291] sm:%s283] %v292
                  %v294 = vld [vmem:[%s290 + $0x4] sm:%s283]
                  %295 = vst [vmem:[%s291 + $0x4] sm:%s283] %v294
                  %v296 = vld [vmem:[%s290 + $0x10] sm:%s283]
                  %297 = vst [vmem:[%s291 + $0x8] sm:%s283] %v296
                  %v298 = vld [vmem:[%s290 + $0x14] sm:%s283]
                  %299 = vst [vmem:[%s291 + $0xc] sm:%s283] %v298
                $region67: #{tpu_custom_call.1} parent=54 // loop_footer
                  %s289 = sadd.s32 1, %s285
                $region68: #{tpu_custom_call.1} parent=54 // loop_footer_branch
                  %284 = sbr.rel target = $region64
                $region69: #{tpu_custom_call.1} parent=54 // loop_exit
                  _
              $region55: #{tpu_custom_call.1} parent=39 // pred_fallthru
                _
            $region40: #{tpu_custom_call.1} parent=35 // pred_fallthru
              _
            // Predicated region
            $region41: #{tpu_custom_call.1} parent=35 // pred_check
              _
            $region42: #{tpu_custom_call.1} parent=35 // pred_check_branch
              %253 = sbr.rel (0) target = $region44
            $region43: #{tpu_custom_call.1} parent=35 // pred_region
              %s255 = ssub.s32 16, 1
              loop: start=0, step=1, limit=1
              $region45: #{tpu_custom_call.1} parent=43 // loop_pre_header
                _
              $region46: #{tpu_custom_call.1} parent=43 // loop_header
                %s257 = sphi 0, %s261
                %p258 = scmp.ge.s32.totalorder %s257, 1
                %s262 = sphi %s247, %s247
                %s263 = sphi %s244, %s244
              $region47: #{tpu_custom_call.1} parent=43 // loop_header_branch
                %260 = sbr.rel (%p258) target = $region51
              $region48: #{tpu_custom_call.1} parent=43 // loop_body
                %v264 = vld [vmem:[%s262] sm:%s255]
                %265 = vst [vmem:[%s263] sm:%s255] %v264
                %v266 = vld [vmem:[%s262 + $0x4] sm:%s255]
                %267 = vst [vmem:[%s263 + $0x4] sm:%s255] %v266
                %v268 = vld [vmem:[%s262 + $0x10] sm:%s255]
                %269 = vst [vmem:[%s263 + $0x8] sm:%s255] %v268
                %v270 = vld [vmem:[%s262 + $0x14] sm:%s255]
                %271 = vst [vmem:[%s263 + $0xc] sm:%s255] %v270
              $region49: #{tpu_custom_call.1} parent=43 // loop_footer
                %s261 = sadd.s32 1, %s257
              $region50: #{tpu_custom_call.1} parent=43 // loop_footer_branch
                %256 = sbr.rel target = $region46
              $region51: #{tpu_custom_call.1} parent=43 // loop_exit
                _
            $region44: #{tpu_custom_call.1} parent=35 // pred_fallthru
              _
          $region36: #{tpu_custom_call.1} parent=31 // pred_fallthru
            _
          %300 = vnop
        $region32: #{tpu_custom_call.1} parent=27 // pred_fallthru
          _
        // Predicated region
        $region70: #{tpu_custom_call.1} parent=27 // pred_check
          %p301 = pneg %p109
        $region71: #{tpu_custom_call.1} parent=27 // pred_check_branch
          %303 = sbr.rel (%p301) target = $region73
        $region72: #{tpu_custom_call.1} parent=27 // pred_region
          %s304 = smul.u32 2, %s21
          %p305 = scmp.lt.s32.totalorder %s304, 3
          %s306 = scalar_select %p305, %s304, 3
          %s307 = smul.addr %s306, 8
          %s308 = scalar_lea.vmem %s3, %s307
          %s309 = smul.u32 2, %s21
        $region73: #{tpu_custom_call.1} parent=27 // pred_fallthru
          _
      $region28: #{tpu_custom_call.1} parent=5 // pred_fallthru
        _
      %p310 = scmp.le.s32.totalorder 1, %s21
      %p311 = scmp.lt.s32.totalorder %s21, 3
      %p312 = pnand %p310, %p311
      %p313 = pneg %p312
      // Predicated region
      $region74: #{tpu_custom_call.1} parent=5 // pred_check
        _
      $region75: #{tpu_custom_call.1} parent=5 // pred_check_branch
        %315 = sbr.rel (%p312) target = $region77
      $region76: #{tpu_custom_call.1} parent=5 // pred_region
        %s316 = ssub.s32 %s21, 1
        %s317 = sand.u32 %s34, 1
        %s318 = sand.u32 %s34, 1
        %s319 = smul.addr %s318, 16
        %s320 = scalar_lea.vmem [#allocation2], %s319
        // Predicated region
        $region78: #{tpu_custom_call.1} parent=76 // pred_check
          %p321 = pneg %p47
        $region79: #{tpu_custom_call.1} parent=76 // pred_check_branch
          %323 = sbr.rel (%p321) target = $region81
        $region80: #{tpu_custom_call.1} parent=76 // pred_region
          _
        $region81: #{tpu_custom_call.1} parent=76 // pred_fallthru
          _
        // Predicated region
        $region82: #{tpu_custom_call.1} parent=76 // pred_check
          %p324 = pneg %p68
        $region83: #{tpu_custom_call.1} parent=76 // pred_check_branch
          %326 = sbr.rel (%p324) target = $region85
        $region84: #{tpu_custom_call.1} parent=76 // pred_region
          %328 = dma.done [#allocation4], 512
        $region85: #{tpu_custom_call.1} parent=76 // pred_fallthru
          _
        // Predicated region
        $region86: #{tpu_custom_call.1} parent=76 // pred_check
          %p329 = pneg %p89
        $region87: #{tpu_custom_call.1} parent=76 // pred_check_branch
          %331 = sbr.rel (%p329) target = $region89
        $region88: #{tpu_custom_call.1} parent=76 // pred_region
          %333 = dma.done [#allocation7], 32
        $region89: #{tpu_custom_call.1} parent=76 // pred_fallthru
          _
        %s334 = sand.u32 %s34, 1
        %s335 = sand.u32 %s34, 1
        %s336 = smul.addr %s335, 16
        %s337 = scalar_lea.vmem [#allocation2], %s336
        %p338 = pneg %p47
        %p339 = pneg %p44
        %p340 = pneg %p68
        %p341 = pneg %p65
        %p342 = pneg %p89
        %p343 = pneg %p86
        %s344 = smul.u32 2, %s26
        %p345 = scmp.lt.s32.totalorder %s344, 3
        %s346 = scalar_select %p345, %s344, 3
        %s347 = smul.addr %s346, 8
        %s348 = scalar_lea.vmem %s3, %s347
        %p349 = pneg %p115
        %p350 = pneg %p112
        %p351 = pneg %p136
        %p352 = pneg %p133
        %p353 = pneg %p162
        %p354 = pneg %p159
        %s355 = sand.u32 %s149, 1
        %s356 = scalar_lea.sflag [#allocation5], %s355
        %s357 = sand.u32 %s149, 1
        %s358 = smul.addr %s357, 8
        %s359 = scalar_lea.vmem [#allocation8], %s358
        %p360 = pneg %p188
        %p361 = pneg %p185
        %s362 = sand.u32 %s175, 1
        %s363 = scalar_lea.sflag [#allocation10], %s362
        %s364 = sand.u32 %s175, 1
        %s365 = scalar_lea.vmem [#allocation9], %s364
        %s366 = smul.u32 2, %s26
        %s367 = smul.u32 2, %s26
        %p368 = scmp.lt.s32.totalorder %s367, 3
        %s369 = scalar_select %p368, %s367, 3
        %s370 = smul.addr %s369, 8
        %s371 = scalar_lea.vmem %s3, %s370
        %s372 = smul.u32 2, %s26
        %s373 = smul.u32 2, %s26
        %v375 = vld [vmem:[%s371] sm:$0xff]
        %v376 = vld [vmem:[%s371 + $0x8] sm:$0xff]
        %v377 = vlaneseq
        %v378 = vand.u32 %v377, 127
        %379 = vset.pattern.permute.xlu0 0
        %380 = vperm.xlu0 %379, %v375
        %v381 = vpop.permute.xlu0 %380
        %382 = vset.pattern.permute.xlu0 0
        %383 = vperm.xlu0 %382, %v376
        %v384 = vpop.permute.xlu0 %383
        %vm385 = vcmp.eq.s32.totalorder %v378, %v381
        %vm386 = vcmp.eq.s32.totalorder %v378, %v384
        %v387 = vsel %vm385, 1, 0
        %v388 = vsel %vm386, 1, 0
        %v389 = vcvt.s32.f32 %v387
        %v390 = vcvt.s32.f32 %v388
        %vm391 = vcmp.ge.s32.totalorder %v375, 0
        %vm392 = vcmp.ge.s32.totalorder %v376, 0
        %vm393 = vcmp.ne.s32.totalorder %v375, 9
        %vm394 = vcmp.ne.s32.totalorder %v376, 9
        %vm395 = vmand %vm391, %vm393
        %vm396 = vmand %vm392, %vm394
        %v397 = vsel %vm395, 1, 0
        %v398 = vsel %vm396, 1, 0
        %v399 = vcvt.s32.f32 %v397
        %v400 = vcvt.s32.f32 %v398
        %v401 = vld [vmem:[%s4] sm:$0x1]
        %v403 = vperm.slane %v401, 0
        %v405 = vmul.f32 %v389, %v403
        %v406 = vmul.f32 %v390, %v403
        %407 = vadd.xlane.f32.xlu0 %v405
        %v408 = vpop.xlane.xlu0 %407
        %409 = vadd.xlane.f32.xlu0 %v406
        %v410 = vpop.xlane.xlu0 %409
        %vm411 = vcmask 7168
        %v412 = vsel %vm411, %v408, 0.0
        %v413 = vsel %vm411, %v410, 0.0
        %v414 = vadd.f32 %v412, %v413
        %415 = vadd.xlane.f32.xlu0 %v414
        %v416 = vpop.xlane.xlu0 %415
        %v417 = vrot.slane %v416, 4
        %v418 = vadd.f32 %v416, %v417
        %v419 = vrot.slane %v418, 2
        %v420 = vadd.f32 %v418, %v419
        %v421 = vrot.slane %v420, 1
        %v422 = vadd.f32 %v420, %v421
        %s423 = vtos %v422
        %v424 = vld [vmem:[%s320] sm:$0xf]
        %v425 = vld [vmem:[%s320 + $0x4] sm:$0xf]
        %v426 = vld [vmem:[#allocation3] sm:$0xf]
        %v427 = vld [vmem:[#allocation3 + $0x4] sm:$0xf]
        %v428 = vld [vmem:[#allocation3 + $0x8] sm:$0xf]
        %v429 = vld [vmem:[#allocation3 + $0xc] sm:$0xf]
        %v430 = vld [vmem:[#allocation6] sm:$0x1]
        %v432 = vperm.slane %v430, 0
        %v436 = vunpack.c.l.b16 %v424
        %v437 = vunpack.c.l.b16 %v425
        %v438 = vpack.c.b16 %v437, %v436
        %v443 = vunpack.c.l.b16 %v426
        %v444 = vunpack.c.l.b16 %v427
        %v445 = vunpack.c.l.b16 %v428
        %v446 = vunpack.c.l.b16 %v429
        %v447 = vpack.c.b16 %v444, %v443
        %v448 = vpack.c.b16 %v446, %v445
        %vm451 = vcmask 261120
        %v453 = vsel %vm451, %v438, 0
        %455 = vmatpush.bf16.msra.mxu0 0
        %456 = vmatpush.bf16.msra.mxu0 0
        %457 = vmatpush.bf16.msra.mxu0 0
        %458 = vmatpush.bf16.msra.mxu0 0
        %459 = vmatpush.bf16.msra.mxu0 0
        %460 = vmatpush.bf16.msra.mxu0 0
        %461 = vmatpush.bf16.msra.mxu0 %v448
        %462 = vmatpush.bf16.msra.mxu0 %v447
        %463 = vmatmul.bf16.gmra.mxu0 %v453
        %v464 = vpop.f32.mrf.mxu0
        %v465 = vadd.f32 %v432, %v464
        %v466 = vpop.f32.mrf.mxu0
        %v467 = vadd.f32 %v432, %v466
        %468 = vdwg.mxu0
        %v469 = vpack.c.bf16 %v465, %v465
        %v470 = vpack.c.bf16 %v467, %v467
        %471 = vst [vmem:[%s359] sm:$0xf] %v469
        %472 = vst [vmem:[%s359 + $0x4] sm:$0xf] %v470
        %473 = vmax.xlane.f32.xlu0 %v465
        %v474 = vpop.xlane.xlu0 %473
        %475 = vmax.xlane.f32.xlu0 %v467
        %v476 = vpop.xlane.xlu0 %475
        %v477 = vsub.f32 %v465, %v474
        %v478 = vsub.f32 %v467, %v476
        %v479 = vmul.f32 %v477, 1.442695
        %v480 = vpow.pop %v479
        %v481 = vmul.f32 %v478, 1.442695
        %v482 = vpow.pop %v481
        %483 = vadd.xlane.f32.xlu0 %v480
        %v484 = vpop.xlane.xlu0 %483
        %485 = vadd.xlane.f32.xlu0 %v482
        %v486 = vpop.xlane.xlu0 %485
        %v487 = vlog2.pop %v484
        %v488 = vmul.f32 %v487, 0.6931472
        %v489 = vlog2.pop %v486
        %v490 = vmul.f32 %v489, 0.6931472
        %v491 = vadd.f32 %v474, %v488
        %v492 = vadd.f32 %v476, %v490
        %v493 = vmul.f32 %v389, %v465
        %v494 = vmul.f32 %v390, %v467
        %495 = vadd.xlane.f32.xlu0 %v493
        %v496 = vpop.xlane.xlu0 %495
        %497 = vadd.xlane.f32.xlu0 %v494
        %v498 = vpop.xlane.xlu0 %497
        %v499 = vsub.f32 %v491, %v496
        %v500 = vsub.f32 %v492, %v498
        %v501 = vmul.f32 %v408, %v499
        %v502 = vmul.f32 %v410, %v500
        %v503 = vsel %vm411, %v501, 0.0
        %v504 = vsel %vm411, %v502, 0.0
        %v505 = vadd.f32 %v503, %v504
        %506 = vadd.xlane.f32.xlu0 %v505
        %v507 = vpop.xlane.xlu0 %506
        %v508 = vrot.slane %v507, 4
        %v509 = vadd.f32 %v507, %v508
        %v510 = vrot.slane %v509, 2
        %v511 = vadd.f32 %v509, %v510
        %v512 = vrot.slane %v511, 1
        %v513 = vadd.f32 %v511, %v512
        %s514 = vtos %v513
        %vm515 = vcmp.eq.s32.totalorder %v378, 9
        %v516 = vsel %vm515, 0.0, %v480
        %v517 = vsel %vm515, 0.0, %v482
        %518 = vadd.xlane.f32.xlu0 %v516
        %v519 = vpop.xlane.xlu0 %518
        %520 = vadd.xlane.f32.xlu0 %v517
        %v521 = vpop.xlane.xlu0 %520
        %v522 = vmax.f32 %v519, 1e-30
        %v523 = vmax.f32 %v521, 1e-30
        %v524 = vrcp.pop %v522
        %v525 = vmul.f32 %v522, %v524
        %v526 = vsub.f32 1.0, %v525
        %v527 = vmul.f32 %v524, %v526
        %v528 = vadd.f32 %v524, %v527
        %vm529 = vweird.f32 %v522
        %vm530 = vweird.f32 %v524
        %vm531 = vmor %vm529, %vm530
        %v532 = vsel %vm531, %v524, %v528
        %v533 = vand.u32 2147483647, %v522
        %vm534 = vcmp.eq.f32.partialorder %v533, 8.507059e+37
        %v535 = vand.u32 %v522, 2147483648
        %v536 = vor.u32 1.1754944e-38, %v535
        %v537 = vsel %vm534, %v536, %v532
        %v538 = vrcp.pop %v523
        %v539 = vmul.f32 %v523, %v538
        %v540 = vsub.f32 1.0, %v539
        %v541 = vmul.f32 %v538, %v540
        %v542 = vadd.f32 %v538, %v541
        %vm543 = vweird.f32 %v523
        %vm544 = vweird.f32 %v538
        %vm545 = vmor %vm543, %vm544
        %v546 = vsel %vm545, %v538, %v542
        %v547 = vand.u32 2147483647, %v523
        %vm548 = vcmp.eq.f32.partialorder %v547, 8.507059e+37
        %v549 = vand.u32 %v523, 2147483648
        %v550 = vor.u32 1.1754944e-38, %v549
        %v551 = vsel %vm548, %v550, %v546
        %v552 = vmul.f32 %v516, %v537
        %v553 = vmul.f32 %v517, %v551
        %v554 = vadd.f32 %v552, 1e-05
        %v555 = vadd.f32 %v553, 1e-05
        %s556 = scalar_lea.vmem %s320, 8 [#allocation2]
        %v557 = vld [vmem:[%s556] sm:$0xf]
        %v558 = vld [vmem:[%s556 + $0x4] sm:$0xf]
        %s559 = scalar_lea.vmem [#allocation3], 16
        %v560 = vld [vmem:[%s559] sm:$0xf]
        %v561 = vld [vmem:[%s559 + $0x4] sm:$0xf]
        %v562 = vld [vmem:[%s559 + $0x8] sm:$0xf]
        %v563 = vld [vmem:[%s559 + $0xc] sm:$0xf]
        %s564 = scalar_lea.vmem [#allocation6], 1
        %v565 = vld [vmem:[%s564] sm:$0x1]
        %v567 = vperm.slane %v565, 0
        %v571 = vunpack.c.l.b16 %v557
        %v572 = vunpack.c.l.b16 %v558
        %v573 = vpack.c.b16 %v572, %v571
        %v578 = vunpack.c.l.b16 %v560
        %v579 = vunpack.c.l.b16 %v561
        %v580 = vunpack.c.l.b16 %v562
        %v581 = vunpack.c.l.b16 %v563
        %v582 = vpack.c.b16 %v579, %v578
        %v583 = vpack.c.b16 %v581, %v580
        %v587 = vsel %vm451, %v573, 0
        %589 = vmatpush.bf16.msra.mxu0 0
        %590 = vmatpush.bf16.msra.mxu0 0
        %591 = vmatpush.bf16.msra.mxu0 0
        %592 = vmatpush.bf16.msra.mxu0 0
        %593 = vmatpush.bf16.msra.mxu0 0
        %594 = vmatpush.bf16.msra.mxu0 0
        %595 = vmatpush.bf16.msra.mxu0 %v583
        %596 = vmatpush.bf16.msra.mxu0 %v582
        %597 = vmatmul.bf16.gmra.mxu0 %v587
        %v598 = vpop.f32.mrf.mxu0
        %v599 = vadd.f32 %v567, %v598
        %v600 = vpop.f32.mrf.mxu0
        %v601 = vadd.f32 %v567, %v600
        %602 = vdwg.mxu0
        %603 = vmax.xlane.f32.xlu0 %v599
        %v604 = vpop.xlane.xlu0 %603
        %605 = vmax.xlane.f32.xlu0 %v601
        %v606 = vpop.xlane.xlu0 %605
        %v607 = vsub.f32 %v599, %v604
        %v608 = vsub.f32 %v601, %v606
        %v609 = vmul.f32 %v607, 1.442695
        %v610 = vpow.pop %v609
        %v611 = vmul.f32 %v608, 1.442695
        %v612 = vpow.pop %v611
        %613 = vadd.xlane.f32.xlu0 %v610
        %v614 = vpop.xlane.xlu0 %613
        %615 = vadd.xlane.f32.xlu0 %v612
        %v616 = vpop.xlane.xlu0 %615
        %v617 = vlog2.pop %v614
        %v618 = vmul.f32 %v617, 0.6931472
        %v619 = vlog2.pop %v616
        %v620 = vmul.f32 %v619, 0.6931472
        %v621 = vadd.f32 %v604, %v618
        %v622 = vadd.f32 %v606, %v620
        %v623 = vmul.f32 %v389, %v599
        %v624 = vmul.f32 %v390, %v601
        %625 = vadd.xlane.f32.xlu0 %v623
        %v626 = vpop.xlane.xlu0 %625
        %627 = vadd.xlane.f32.xlu0 %v624
        %v628 = vpop.xlane.xlu0 %627
        %v629 = vsub.f32 %v621, %v626
        %v630 = vsub.f32 %v622, %v628
        %v631 = vmul.f32 %v408, %v629
        %v632 = vmul.f32 %v410, %v630
        %v633 = vsel %vm411, %v631, 0.0
        %v634 = vsel %vm411, %v632, 0.0
        %v635 = vadd.f32 %v633, %v634
        %636 = vadd.xlane.f32.xlu0 %v635
        %v637 = vpop.xlane.xlu0 %636
        %v638 = vrot.slane %v637, 4
        %v639 = vadd.f32 %v637, %v638
        %v640 = vrot.slane %v639, 2
        %v641 = vadd.f32 %v639, %v640
        %v642 = vrot.slane %v641, 1
        %v643 = vadd.f32 %v641, %v642
        %s644 = vtos %v643
        %v645 = vsel %vm515, 0.0, %v610
        %v646 = vsel %vm515, 0.0, %v612
        %647 = vadd.xlane.f32.xlu0 %v645
        %v648 = vpop.xlane.xlu0 %647
        %649 = vadd.xlane.f32.xlu0 %v646
        %v650 = vpop.xlane.xlu0 %649
        %v651 = vmax.f32 %v648, 1e-30
        %v652 = vmax.f32 %v650, 1e-30
        %v653 = vrcp.pop %v651
        %v654 = vmul.f32 %v651, %v653
        %v655 = vsub.f32 1.0, %v654
        %v656 = vmul.f32 %v653, %v655
        %v657 = vadd.f32 %v653, %v656
        %vm658 = vweird.f32 %v651
        %vm659 = vweird.f32 %v653
        %vm660 = vmor %vm658, %vm659
        %v661 = vsel %vm660, %v653, %v657
        %v662 = vand.u32 2147483647, %v651
        %vm663 = vcmp.eq.f32.partialorder %v662, 8.507059e+37
        %v664 = vand.u32 %v651, 2147483648
        %v665 = vor.u32 1.1754944e-38, %v664
        %v666 = vsel %vm663, %v665, %v661
        %v667 = vrcp.pop %v652
        %v668 = vmul.f32 %v652, %v667
        %v669 = vsub.f32 1.0, %v668
        %v670 = vmul.f32 %v667, %v669
        %v671 = vadd.f32 %v667, %v670
        %vm672 = vweird.f32 %v652
        %vm673 = vweird.f32 %v667
        %vm674 = vmor %vm672, %vm673
        %v675 = vsel %vm674, %v667, %v671
        %v676 = vand.u32 2147483647, %v652
        %vm677 = vcmp.eq.f32.partialorder %v676, 8.507059e+37
        %v678 = vand.u32 %v652, 2147483648
        %v679 = vor.u32 1.1754944e-38, %v678
        %v680 = vsel %vm677, %v679, %v675
        %v681 = vmul.f32 %v645, %v666
        %v682 = vmul.f32 %v646, %v680
        %v683 = vadd.f32 %v681, 1e-05
        %v684 = vadd.f32 %v682, 1e-05
        %v685 = vmul.f32 %v554, %v683
        %v686 = vmul.f32 %v555, %v684
        %v687 = vadd.f32 %v552, 0.0
        %v688 = vadd.f32 %v553, 0.0
        %v689 = vadd.f32 %v687, %v681
        %v690 = vadd.f32 %v688, %v682
        %v691 = vmul.f32 %v689, 0.5
        %v692 = vmul.f32 %v690, 0.5
        %v693 = vadd.f32 %v691, 1e-05
        %v694 = vadd.f32 %v692, 1e-05
        %v695 = vlog2.pop %v693
        %v696 = vmul.f32 %v695, 0.6931472
        %v697 = vlog2.pop %v694
        %v698 = vmul.f32 %v697, 0.6931472
        %v699 = vmul.f32 %v696, 2.0
        %v700 = vmul.f32 %v698, 2.0
        %v701 = vlog2.pop %v685
        %v702 = vmul.f32 %v701, 0.6931472
        %v703 = vlog2.pop %v686
        %v704 = vmul.f32 %v703, 0.6931472
        %v705 = vsub.f32 %v699, %v702
        %v706 = vsub.f32 %v700, %v704
        %v707 = vmul.f32 %v691, %v705
        %v708 = vmul.f32 %v692, %v706
        %709 = vadd.xlane.f32.xlu0 %v707
        %v710 = vpop.xlane.xlu0 %709
        %711 = vadd.xlane.f32.xlu0 %v708
        %v712 = vpop.xlane.xlu0 %711
        %v713 = vmul.f32 %v710, 0.5
        %v714 = vmul.f32 %v712, 0.5
        %v715 = vmul.f32 %v713, %v399
        %v716 = vmul.f32 %v714, %v400
        %v717 = vsel %vm411, %v715, 0.0
        %v718 = vsel %vm411, %v716, 0.0
        %v719 = vadd.f32 %v717, %v718
        %720 = vadd.xlane.f32.xlu0 %v719
        %v721 = vpop.xlane.xlu0 %720
        %v722 = vrot.slane %v721, 4
        %v723 = vadd.f32 %v721, %v722
        %v724 = vrot.slane %v723, 2
        %v725 = vadd.f32 %v723, %v724
        %v726 = vrot.slane %v725, 1
        %v727 = vadd.f32 %v725, %v726
        %s728 = vtos %v727
        %v729 = vsel %vm411, %v399, 0.0
        %v730 = vsel %vm411, %v400, 0.0
        %v731 = vadd.f32 %v729, %v730
        %732 = vadd.xlane.f32.xlu0 %v731
        %v733 = vpop.xlane.xlu0 %732
        %v734 = vrot.slane %v733, 4
        %v735 = vadd.f32 %v733, %v734
        %v736 = vrot.slane %v735, 2
        %v737 = vadd.f32 %v735, %v736
        %v738 = vrot.slane %v737, 1
        %v739 = vadd.f32 %v737, %v738
        %s740 = vtos %v739
        %vm741 = vcmp.eq.s32.totalorder %v378, 0
        %v742 = vsel %vm741, 1, 0
        %v743 = vcvt.s32.f32 %v742
        %v744 = vstv %s514
        %v745 = vmul.f32 %v744, %v743
        %v746 = vadd.f32 %v745, 0.0
        %vm747 = vcmp.eq.s32.totalorder %v378, 1
        %v748 = vsel %vm747, 1, 0
        %v749 = vcvt.s32.f32 %v748
        %v750 = vstv %s644
        %v751 = vmul.f32 %v750, %v749
        %v752 = vadd.f32 %v746, %v751
        %vm753 = vcmp.eq.s32.totalorder %v378, 2
        %v754 = vsel %vm753, 1, 0
        %v755 = vcvt.s32.f32 %v754
        %v756 = vstv %s423
        %v757 = vmul.f32 %v756, %v755
        %v758 = vadd.f32 %v752, %v757
        %vm759 = vcmp.eq.s32.totalorder %v378, 3
        %v760 = vsel %vm759, 1, 0
        %v761 = vcvt.s32.f32 %v760
        %v762 = vstv %s728
        %v763 = vmul.f32 %v762, %v761
        %v764 = vadd.f32 %v758, %v763
        %vm765 = vcmp.eq.s32.totalorder %v378, 4
        %v766 = vsel %vm765, 1, 0
        %v767 = vcvt.s32.f32 %v766
        %v768 = vstv %s740
        %v769 = vmul.f32 %v768, %v767
        %v770 = vadd.f32 %v764, %v769
        %771 = vst [vmem:[%s365] sm:$0x1] %v770
        %s772 = sand.u32 %s149, 1
        %s773 = scalar_lea.sflag [#allocation5], %s772
        %s774 = sand.u32 %s149, 1
        %s775 = smul.addr %s774, 8
        %s776 = scalar_lea.vmem [#allocation8], %s775
        %s777 = sand.u32 %s175, 1
        %s778 = scalar_lea.sflag [#allocation10], %s777
        %s779 = sand.u32 %s175, 1
        %s780 = scalar_lea.vmem [#allocation9], %s779
        // Predicated region
        $region90: #{tpu_custom_call.1} parent=76 // pred_check
          %p781 = pneg %p159
        $region91: #{tpu_custom_call.1} parent=76 // pred_check_branch
          %783 = sbr.rel (%p781) target = $region93
        $region92: #{tpu_custom_call.1} parent=76 // pred_region
          %s784 = smul.u32 2, %s26
          %786 = vsyncadd %s773, 0
          %s787 = smul.addr %s784, 4
          %s788 = scalar_lea.hbm %s5, %s787
          %s789 = sshll.u32 %s776, 4
          %s790 = int_to_ptr.vmem [resolvable:$true] %s789
          %s791 = sshll.u32 %s788, 4
          %s792 = int_to_ptr.hbm [resolvable:$true] %s791
          %797 = dma.vmem_to_hbm [thread:$0]  %s790, 128, %s792, %s773, 64, 64, 4
        $region93: #{tpu_custom_call.1} parent=76 // pred_fallthru
          _
        // Predicated region
        $region94: #{tpu_custom_call.1} parent=76 // pred_check
          %p798 = pneg %p185
        $region95: #{tpu_custom_call.1} parent=76 // pred_check_branch
          %800 = sbr.rel (%p798) target = $region97
        $region96: #{tpu_custom_call.1} parent=76 // pred_region
          %802 = vsyncadd %s778, 0
          %s803 = scalar_lea.hbm %s6, %s26
          %s805 = sshll.u32 %s780, 4
          %s806 = int_to_ptr.vmem [resolvable:$true] %s805
          %s807 = sshll.u32 %s803, 4
          %s808 = int_to_ptr.hbm [resolvable:$true] %s807
          %810 = dma.vmem_to_hbm [thread:$0]  %s806, 16, %s808, %s778
        $region97: #{tpu_custom_call.1} parent=76 // pred_fallthru
          _
      $region77: #{tpu_custom_call.1} parent=5 // pred_fallthru
        _
      %p811 = scmp.le.s32.totalorder 2, %s21
      // Predicated region
      $region98: #{tpu_custom_call.1} parent=5 // pred_check
        %p812 = pneg %p811
      $region99: #{tpu_custom_call.1} parent=5 // pred_check_branch
        %814 = sbr.rel (%p812) target = $region101
      $region100: #{tpu_custom_call.1} parent=5 // pred_region
        %s815 = ssub.s32 %s21, 2
        // Predicated region
        $region102: #{tpu_custom_call.1} parent=100 // pred_check
          %p816 = pneg %p165
        $region103: #{tpu_custom_call.1} parent=100 // pred_check_branch
          %818 = sbr.rel (%p816) target = $region105
        $region104: #{tpu_custom_call.1} parent=100 // pred_region
          %s819 = sand.u32 %s150, 1
          %s820 = scalar_lea.sflag [#allocation5], %s819
          %s821 = sand.u32 %s150, 1
          %s822 = smul.addr %s821, 8
          %s823 = scalar_lea.vmem [#allocation8], %s822
          %825 = dma.done %s820, 128
        $region105: #{tpu_custom_call.1} parent=100 // pred_fallthru
          _
        // Predicated region
        $region106: #{tpu_custom_call.1} parent=100 // pred_check
          %p826 = pneg %p191
        $region107: #{tpu_custom_call.1} parent=100 // pred_check_branch
          %828 = sbr.rel (%p826) target = $region109
        $region108: #{tpu_custom_call.1} parent=100 // pred_region
          %s829 = sand.u32 %s176, 1
          %s830 = scalar_lea.sflag [#allocation10], %s829
          %s831 = sand.u32 %s176, 1
          %s832 = scalar_lea.vmem [#allocation9], %s831
          %834 = dma.done %s830, 16
        $region109: #{tpu_custom_call.1} parent=100 // pred_fallthru
          _
      $region101: #{tpu_custom_call.1} parent=5 // pred_fallthru
        _
    $region6: #{tpu_custom_call.1} parent=1 // loop_footer
      %s25 = sadd.s32 1, %s21
    $region7: #{tpu_custom_call.1} parent=1 // loop_footer_branch
      %20 = sbr.rel target = $region3
    $region8: #{tpu_custom_call.1} parent=1 // loop_exit
      _
    %835 = vsyncpa [#allocation4], 1
    %s836 = scalar_lea.sflag [#allocation4], 1
    %837 = vsyncpa %s836, 1
    %838 = vsyncpa [#allocation7], 1
    %839 = vsyncpa [#allocation5], 1
    %s840 = scalar_lea.sflag [#allocation5], 1
    %841 = vsyncpa %s840, 1
    %842 = vsyncpa [#allocation10], 1
    %s843 = scalar_lea.sflag [#allocation10], 1
    %844 = vsyncpa %s843, 1

</llo_original>
